<compile_context>
chip_gen: v6e
topology: v6e:2x2x1
jax: 0.10.0
libtpu: 0.0.40
codegen_flags: <defaults>
</compile_context>

<pallas_src>
import math
import functools

import jax
import jax.numpy as jnp
from jax.experimental import pallas as pl
from jax.experimental.pallas import tpu as pltpu


def _silu(x):
    # exact sigmoid (feedback: avoid approx reciprocal near the GroupNorms)
    return x / (1.0 + jnp.exp(-x))


# ----------------------------------------------------------------------------
# Tiny embedding projections: one batched matmul each, single pallas_call step.
#   style = zemb @ [W_style0 | W_style1] + b   -> [gamma0|beta0|gamma1|beta1]
#   tadd  = silu(temb) @ W_dense0 + b_dense0   -> Dense_0
# ----------------------------------------------------------------------------
def _emb_kernel(z_ref, t_ref, wz_ref, bz_ref, wt_ref, bt_ref, style_ref, tadd_ref):
    f32 = jnp.float32
    style_ref[...] = (jnp.dot(z_ref[...], wz_ref[...], preferred_element_type=f32)
                      + bz_ref[...])
    tadd_ref[...] = (jnp.dot(_silu(t_ref[...]), wt_ref[...], preferred_element_type=f32)
                     + bt_ref[...])


def emb_linear(zemb, temb, wz, bz, wt, bt):
    N = zemb.shape[0]
    S = wz.shape[1]
    Cout = wt.shape[1]
    return pl.pallas_call(
        _emb_kernel,
        out_shape=(jax.ShapeDtypeStruct((N, S), jnp.float32),
                   jax.ShapeDtypeStruct((N, Cout), jnp.float32)),
    )(zemb.astype(jnp.float32), temb.astype(jnp.float32),
      wz.astype(jnp.float32), bz.reshape(1, S).astype(jnp.float32),
      wt.astype(jnp.float32), bt.reshape(1, Cout).astype(jnp.float32))


# ----------------------------------------------------------------------------
# In-kernel helpers (trace-time inlined).
# ----------------------------------------------------------------------------
def _adagn_silu(v2, gamma, beta, ag, inv_cnt, eps):
    """GroupNorm(affine=False, eps) + gamma*.+beta + SiLU on a (rows, C) f32 slab.

    Group stats: per-channel sums (XLU reductions) -> tiny (1,C) @ (C,C) same-group
    averaging matmul; cancellation-safe two-pass variance."""
    f32 = jnp.float32
    ch_sum = jnp.sum(v2, axis=0, keepdims=True)                        # (1, C)
    gmean = jnp.dot(ch_sum, ag, preferred_element_type=f32) * inv_cnt
    cen = v2 - gmean
    ch_sq = jnp.sum(cen * cen, axis=0, keepdims=True)                  # (1, C)
    gvar = jnp.dot(ch_sq, ag, preferred_element_type=f32) * inv_cnt
    y = gamma * (cen * jax.lax.rsqrt(gvar + eps)) + beta
    return _silu(y)


def _conv3x3_taps(src_hwc, pad_ref, w_ref, bias_row, Hs, Ws, C):
    """3x3 conv (stride 1, zero pad 1) as 9 accumulated bf16 MXU matmuls (K=C each).

    pad_ref: (Hs+2, Ws+2, C) bf16 halo scratch.  Only the 1-element border is zeroed
    (the interior is fully overwritten every step); each tap feeds a shifted slice of
    the halo straight to the MXU -> no materialized (Hs*Ws, 9*C) im2col buffer."""
    zrow = jnp.zeros((Ws + 2, C), pad_ref.dtype)
    zcol = jnp.zeros((Hs + 2, C), pad_ref.dtype)
    pad_ref[0, :, :] = zrow
    pad_ref[Hs + 1, :, :] = zrow
    pad_ref[:, 0, :] = zcol
    pad_ref[:, Ws + 1, :] = zcol
    pad_ref[1:Hs + 1, 1:Ws + 1, :] = src_hwc.astype(pad_ref.dtype)

    acc = None
    for t in range(9):
        ky, kx = divmod(t, 3)
        tap = pad_ref[ky:ky + Hs, kx:kx + Ws, :].reshape(Hs * Ws, C)   # bf16
        p = jnp.dot(tap, w_ref[t], preferred_element_type=jnp.float32)
        acc = p if acc is None else acc + p
    return acc + bias_row                                              # (Hs*Ws, Cout) f32


# ----------------------------------------------------------------------------
# Fully fused down-block kernel (one grid step per batch element).
# ----------------------------------------------------------------------------
def _block_down_kernel(x_ref, g0_ref, be0_ref, g1_ref, be1_ref, tadd_ref,
                       ag0_ref, ag1_ref, w0_ref, cb0_ref, w1_ref, cb1_ref,
                       w2_ref, cb2_ref, out_ref, pad0_ref, pad1_ref,
                       *, H, W, Cin, Cout, eps, res_scale):
    f32 = jnp.float32
    bf16 = jnp.bfloat16
    H2, W2 = H // 2, W // 2

    v = x_ref[0].astype(f32)                         # (H, W, Cin)
    v2 = v.reshape(H * W, Cin)

    gamma0 = g0_ref[0]                               # (1, Cin)
    beta0 = be0_ref[0]
    gamma1 = g1_ref[0]                               # (1, Cout)
    beta1 = be1_ref[0]

    # --- h = act(GroupNorm_0(x, zemb)) ; h = Conv_0(h) ---
    h0 = _adagn_silu(v2, gamma0, beta0, ag0_ref[...], 1.0 / float(H * W), eps)
    h1 = _conv3x3_taps(h0.reshape(H, W, Cin), pad0_ref, w0_ref, cb0_ref[...],
                       H, W, Cin)                    # (H*W, Cout) f32

    # --- Haar DWT of h: W even/odd pair folded onto the lane axis (no stride-2 reads),
    #     H even/odd is an outer-dim integer index ---
    h4 = h1.reshape(H2, 2, W2, 2 * Cout)
    ha = h4[:, 0, :, 0:Cout]
    hb = h4[:, 0, :, Cout:2 * Cout]
    hc = h4[:, 1, :, 0:Cout]
    hd = h4[:, 1, :, Cout:2 * Cout]
    # TODO(synk): verify Haar high-band sign convention against the reference DWT_2D.
    h_ll = (ha + hb + hc + hd) * 0.25                # LL / 2 (reference halves low band only)
    lh = ((ha - hb + hc - hd) * 0.5).reshape(H2 * W2, Cout)
    hl = ((ha + hb - hc - hd) * 0.5).reshape(H2 * W2, Cout)
    hh = ((ha - hb - hc + hd) * 0.5).reshape(H2 * W2, Cout)

    # --- shortcut: Haar LL average of x first, then Conv_2 (1x1) at H/2 x W/2.
    #     Exact: a 1x1 conv is affine, so it commutes with the LL average (bias incl.).
    #     NOTE: this reordering relies on the shortcut being a pure 1x1 conv. ---
    v4 = v.reshape(H2, 2, W, Cin)
    s = v4[:, 0] + v4[:, 1]                          # (H2, W, Cin)
    s4 = s.reshape(H2, W2, 2 * Cin)                  # W pair -> lane axis
    x_ll = ((s4[:, :, 0:Cin] + s4[:, :, Cin:2 * Cin]) * 0.25).reshape(H2 * W2, Cin)
    xs = jnp.dot(x_ll.astype(bf16), w2_ref[...],
                 preferred_element_type=f32) + cb2_ref[...]            # (H2*W2, Cout)

    # --- h += Dense_0(act(temb)); h = act(GroupNorm_1(h, zemb)) ---
    h2 = h_ll.reshape(H2 * W2, Cout) + tadd_ref[0]
    h2 = _adagn_silu(h2, gamma1, beta1, ag1_ref[...], 1.0 / float(H2 * W2), eps)
    # TODO(synk): Dropout_0 is eval-mode identity here (no stochastic drop).

    # --- h = Conv_1(h); out = (x + h) * res_scale (skip_rescale fused) ---
    h3 = _conv3x3_taps(h2.reshape(H2, W2, Cout), pad1_ref, w1_ref, cb1_ref[...],
                       H2, W2, Cout)                 # (H2*W2, Cout) f32
    out = (xs + h3) * res_scale

    # fused lane-dense store: [out | LH | HL | HH]
    out_ref[0] = jnp.concatenate([out, lh, hl, hh], axis=-1).astype(out_ref.dtype)


def block_down(x, gamma0, beta0, gamma1, beta1, tadd, ag0, ag1,
               w0t, cb0, w1t, cb1, w2, cb2, *, eps, res_scale):
    N, H, W, Cin = x.shape
    Cout = w2.shape[1]
    H2, W2 = H // 2, W // 2
    kernel = functools.partial(_block_down_kernel, H=H, W=W, Cin=Cin, Cout=Cout,
                               eps=eps, res_scale=res_scale)
    return pl.pallas_call(
        kernel,
        out_shape=jax.ShapeDtypeStruct((N, H2 * W2, 4 * Cout), jnp.float32),
        grid=(N,),
        in_specs=[
            pl.BlockSpec((1, H, W, Cin), lambda n: (n, 0, 0, 0)),     # x (NHWC)
            pl.BlockSpec((1, 1, Cin), lambda n: (n, 0, 0)),           # gamma0
            pl.BlockSpec((1, 1, Cin), lambda n: (n, 0, 0)),           # beta0
            pl.BlockSpec((1, 1, Cout), lambda n: (n, 0, 0)),          # gamma1
            pl.BlockSpec((1, 1, Cout), lambda n: (n, 0, 0)),          # beta1
            pl.BlockSpec((1, 1, Cout), lambda n: (n, 0, 0)),          # tadd
            pl.BlockSpec((Cin, Cin), lambda n: (0, 0)),               # group-avg matrix 0
            pl.BlockSpec((Cout, Cout), lambda n: (0, 0)),             # group-avg matrix 1
            pl.BlockSpec((9, Cin, Cout), lambda n: (0, 0, 0)),        # conv0 taps (bf16)
            pl.BlockSpec((1, Cout), lambda n: (0, 0)),                # conv0 bias
            pl.BlockSpec((9, Cout, Cout), lambda n: (0, 0, 0)),       # conv1 taps (bf16)
            pl.BlockSpec((1, Cout), lambda n: (0, 0)),                # conv1 bias
            pl.BlockSpec((Cin, Cout), lambda n: (0, 0)),              # conv2 1x1 (bf16)
            pl.BlockSpec((1, Cout), lambda n: (0, 0)),                # conv2 bias
        ],
        out_specs=pl.BlockSpec((1, H2 * W2, 4 * Cout), lambda n: (n, 0, 0)),
        scratch_shapes=[
            pltpu.VMEM((H + 2, W + 2, Cin), jnp.bfloat16),            # conv0 halo
            pltpu.VMEM((H2 + 2, W2 + 2, Cout), jnp.bfloat16),         # conv1 halo
        ],
        compiler_params=pltpu.CompilerParams(
            dimension_semantics=("parallel",),
            # leaves headroom under v7x's 64 MiB physical VMEM; raise on v5e/v6e if
            # banding/tile sizes grow.
            vmem_limit_bytes=48 * 1024 * 1024),
    )(x, gamma0, beta0, gamma1, beta1, tadd, ag0, ag1,
      w0t, cb0, w1t, cb1, w2, cb2)


def group_avg_matrix(C, G):
    # same-group averaging matrix (C divisible by G, as required by nn.GroupNorm)
    cg = C // G
    idx = jnp.arange(C)
    same = (idx[:, None] // cg) == (idx[None, :] // cg)
    return same.astype(jnp.float32) / float(cg)


# ----------------------------------------------------------------------------
# Full forward (down=True path of WaveletResnetBlockBigGANpp_Adagn; act = SiLU)
# ----------------------------------------------------------------------------
def wavelet_resblock_forward(params, x_nchw, temb, zemb, *, down=True, skip_rescale=True):
    if not down:
        # TODO(synk): up=True (IDWT + grouped convH_0) and plain paths not implemented.
        raise NotImplementedError("only the down=True wavelet branch is implemented")

    N, Cin, H, W = x_nchw.shape
    Cout = params["conv0_w"].shape[-1]
    H2, W2 = H // 2, W // 2
    x = jnp.transpose(x_nchw, (0, 2, 3, 1)).astype(jnp.float32)       # NHWC

    G0 = min(Cin // 4, 32)
    G1 = min(Cout // 4, 32)
    ag0 = group_avg_matrix(Cin, G0)
    ag1 = group_avg_matrix(Cout, G1)

    # fused style / temb dense projections (one batched step)
    wz = jnp.concatenate([params["style0_w"], params["style1_w"]], axis=1)
    bz = jnp.concatenate([params["style0_b"], params["style1_b"]])
    style, tadd = emb_linear(zemb, temb, wz, bz, params["dense0_w"], params["dense0_b"])

    # split gamma/beta in the wrapper (free XLA slices); no lane-offset slices in-kernel
    gamma0 = style[:, 0:Cin].reshape(N, 1, Cin)
    beta0 = style[:, Cin:2 * Cin].reshape(N, 1, Cin)
    gamma1 = style[:, 2 * Cin:2 * Cin + Cout].reshape(N, 1, Cout)
    beta1 = style[:, 2 * Cin + Cout:2 * (Cin + Cout)].reshape(N, 1, Cout)
    tadd = tadd.reshape(N, 1, Cout)

    # conv weights: HWIO -> per-tap (9, Cin, Cout), pre-cast ONCE to bf16 (MXU feed)
    w0t = params["conv0_w"].reshape(9 * Cin, Cout).reshape(9, Cin, Cout).astype(jnp.bfloat16)
    w1t = params["conv1_w"].reshape(9 * Cout, Cout).reshape(9, Cout, Cout).astype(jnp.bfloat16)
    w2 = params["conv2_w"].astype(jnp.bfloat16)
    cb0 = params["conv0_b"].reshape(1, Cout).astype(jnp.float32)
    cb1 = params["conv1_b"].reshape(1, Cout).astype(jnp.float32)
    cb2 = params["conv2_b"].reshape(1, Cout).astype(jnp.float32)

    res_scale = (1.0 / math.sqrt(2.0)) if skip_rescale else 1.0

    fused = block_down(x, gamma0, beta0, gamma1, beta1, tadd, ag0, ag1,
                       w0t, cb0, w1t, cb1, w2, cb2, eps=1e-6, res_scale=res_scale)
    fused = fused.reshape(N, H2, W2, 4 * Cout)
    out = fused[..., 0:Cout]
    lh = fused[..., Cout:2 * Cout]
    hl = fused[..., 2 * Cout:3 * Cout]
    hh = fused[..., 3 * Cout:4 * Cout]

    # TODO(synk): NHWC->NCHW transposes kept only for PyTorch API parity; consume NHWC
    # directly downstream to avoid the extra HBM passes.
    to_nchw = lambda t: jnp.transpose(t, (0, 3, 1, 2))
    return to_nchw(out), (to_nchw(lh), to_nchw(hl), to_nchw(hh))


if __name__ == "__main__":
    key = jax.random.PRNGKey(0)
    N, Cin, Cout, H, W = 2, 8, 16, 16, 16
    temb_dim = zemb_dim = 32
    keys = jax.random.split(key, 12)

    def nrm(k, shape, scale=0.1):
        return scale * jax.random.normal(k, shape, jnp.float32)

    params = {
        # AdaptiveGroupNorm 0 style dense: bias[:in_ch]=1, bias[in_ch:]=0
        "style0_w": nrm(keys[0], (zemb_dim, 2 * Cin)),
        "style0_b": jnp.concatenate([jnp.ones((Cin,)), jnp.zeros((Cin,))]).astype(jnp.float32),
        # Conv_0: 3x3 in_ch -> out_ch (HWIO)
        "conv0_w": nrm(keys[1], (3, 3, Cin, Cout)),
        "conv0_b": nrm(keys[2], (Cout,)),
        # Dense_0: temb_dim -> out_ch, zero bias
        "dense0_w": nrm(keys[3], (temb_dim, Cout)),
        "dense0_b": jnp.zeros((Cout,), jnp.float32),
        # AdaptiveGroupNorm 1 style dense
        "style1_w": nrm(keys[4], (zemb_dim, 2 * Cout)),
        "style1_b": jnp.concatenate([jnp.ones((Cout,)), jnp.zeros((Cout,))]).astype(jnp.float32),
        # Conv_1: 3x3 out_ch -> out_ch (init_scale small)
        "conv1_w": nrm(keys[5], (3, 3, Cout, Cout), scale=0.01),
        "conv1_b": jnp.zeros((Cout,), jnp.float32),
        # Conv_2: 1x1 in_ch -> out_ch (stored as (Cin, Cout) matmul weight)
        "conv2_w": nrm(keys[6], (Cin, Cout)),
        "conv2_b": nrm(keys[7], (Cout,)),
    }

    x = jax.random.normal(keys[8], (N, Cin, H, W), jnp.float32)
    temb = jax.random.normal(keys[9], (N, temb_dim), jnp.float32)
    zemb = jax.random.normal(keys[10], (N, zemb_dim), jnp.float32)

    out, hH = wavelet_resblock_forward(params, x, temb, zemb, down=True)
    out = jax.block_until_ready(out)
    hH = jax.block_until_ready(hH)

    assert out.shape == (N, Cout, H // 2, W // 2)
    assert all(t.shape == (N, Cout, H // 2, W // 2) for t in hH)
    assert bool(jnp.all(jnp.isfinite(out)))
    assert all(bool(jnp.all(jnp.isfinite(t))) for t in hH)
    print("KERNEL_OK")
</pallas_src>

<mosaic_0001>
module attributes {stable_mosaic.version = 11 : i64} {
  func.func @_emb_kernel(%arg0: memref<2x32xf32, #tpu.memory_space<vmem>>, %arg1: memref<2x32xf32, #tpu.memory_space<vmem>>, %arg2: memref<32x48xf32, #tpu.memory_space<vmem>>, %arg3: memref<1x48xf32, #tpu.memory_space<vmem>>, %arg4: memref<32x16xf32, #tpu.memory_space<vmem>>, %arg5: memref<1x16xf32, #tpu.memory_space<vmem>>, %arg6: memref<2x48xf32, #tpu.memory_space<vmem>>, %arg7: memref<2x16xf32, #tpu.memory_space<vmem>>) attributes {dimension_semantics = [], scalar_prefetch = 0 : i64, scratch_operands = 0 : i64, tpu.core_type = #tpu.core_type<tc>} {
    %c0 = arith.constant 0 : index
    %c0_0 = arith.constant 0 : index
    %0 = vector.load %arg0[%c0, %c0_0] : memref<2x32xf32, #tpu.memory_space<vmem>>, vector<2x32xf32>
    %c0_1 = arith.constant 0 : index
    %c0_2 = arith.constant 0 : index
    %1 = vector.load %arg2[%c0_1, %c0_2] : memref<32x48xf32, #tpu.memory_space<vmem>>, vector<32x48xf32>
    %cst = arith.constant dense<0.000000e+00> : vector<2x48xf32>
    %2 = tpu.matmul %0, %1, %cst {dimension_numbers = #tpu.dot_dimension_numbers<[1], [0], [0], [1], [0, 0, 1, 1], [], []>} : vector<2x32xf32>, vector<32x48xf32>, vector<2x48xf32> -> vector<2x48xf32>
    %c0_3 = arith.constant 0 : index
    %c0_4 = arith.constant 0 : index
    %3 = vector.load %arg3[%c0_3, %c0_4] : memref<1x48xf32, #tpu.memory_space<vmem>>, vector<1x48xf32>
    %4 = vector.broadcast %3 : vector<1x48xf32> to vector<2x48xf32>
    %5 = arith.addf %2, %4 : vector<2x48xf32>
    %c0_5 = arith.constant 0 : index
    %c0_6 = arith.constant 0 : index
    %6 = vector.load %arg6[%c0_5, %c0_6] : memref<2x48xf32, #tpu.memory_space<vmem>>, vector<2x48xf32>
    tpu.vector_store %arg6[%c0_5, %c0_6], %5 {strides = array<i32>} : memref<2x48xf32, #tpu.memory_space<vmem>>, vector<2x48xf32>,
    %c0_7 = arith.constant 0 : index
    %c0_8 = arith.constant 0 : index
    %7 = vector.load %arg1[%c0_7, %c0_8] : memref<2x32xf32, #tpu.memory_space<vmem>>, vector<2x32xf32>
    %cst_9 = arith.constant 0.000000e+00 : f32
    %8 = vector.broadcast %cst_9 : f32 to vector<2x32xf32>
    %9 = arith.subf %8, %7 : vector<2x32xf32>
    %10 = math.exp %9 : vector<2x32xf32>
    %cst_10 = arith.constant 1.000000e+00 : f32
    %11 = vector.broadcast %cst_10 : f32 to vector<2x32xf32>
    %12 = arith.addf %11, %10 : vector<2x32xf32>
    %13 = arith.divf %7, %12 : vector<2x32xf32>
    %c0_11 = arith.constant 0 : index
    %c0_12 = arith.constant 0 : index
    %14 = vector.load %arg4[%c0_11, %c0_12] : memref<32x16xf32, #tpu.memory_space<vmem>>, vector<32x16xf32>
    %cst_13 = arith.constant dense<0.000000e+00> : vector<2x16xf32>
    %15 = tpu.matmul %13, %14, %cst_13 {dimension_numbers = #tpu.dot_dimension_numbers<[1], [0], [0], [1], [0, 0, 1, 1], [], []>} : vector<2x32xf32>, vector<32x16xf32>, vector<2x16xf32> -> vector<2x16xf32>
    %c0_14 = arith.constant 0 : index
    %c0_15 = arith.constant 0 : index
    %16 = vector.load %arg5[%c0_14, %c0_15] : memref<1x16xf32, #tpu.memory_space<vmem>>, vector<1x16xf32>
    %17 = vector.broadcast %16 : vector<1x16xf32> to vector<2x16xf32>
    %18 = arith.addf %15, %17 : vector<2x16xf32>
    %c0_16 = arith.constant 0 : index
    %c0_17 = arith.constant 0 : index
    %19 = vector.load %arg7[%c0_16, %c0_17] : memref<2x16xf32, #tpu.memory_space<vmem>>, vector<2x16xf32>
    tpu.vector_store %arg7[%c0_16, %c0_17], %18 {strides = array<i32>} : memref<2x16xf32, #tpu.memory_space<vmem>>, vector<2x16xf32>,
    return
  }
}

</mosaic_0001>

<llo_original>
// kernel: tpu_custom_call.1
$region0: #{tpu_custom_call.1}
  #allocation0 [shape = 'u32[]', space=smem, size = 0x4, offset = 0x4, fixed_abs, tag = 'smem constant byte address 0x4 - core index']
  #allocation1 [shape = 'u32[144,128]{1,0:T(1,128)}', space=vmem, size = 0x12000, scoped, tag = 'internal scratch']
  %s0 = inlined_call_operand.vmem [shape: f32[2,32], index: 0, kind: input, shape index: {}]
  %s1 = inlined_call_operand.vmem [shape: f32[2,32], index: 1, kind: input, shape index: {}]
  %s2 = inlined_call_operand.vmem [shape: f32[32,48], index: 2, kind: input, shape index: {}]
  %s3 = inlined_call_operand.vmem [shape: f32[1,48], index: 3, kind: input, shape index: {}]
  %s4 = inlined_call_operand.vmem [shape: f32[32,16], index: 4, kind: input, shape index: {}]
  %s5 = inlined_call_operand.vmem [shape: f32[1,16], index: 5, kind: input, shape index: {}]
  %s6 = inlined_call_operand.hbm [shape: f32[2,48], index: 6, kind: output, shape index: {0}]
  %s7 = inlined_call_operand.hbm [shape: f32[2,16], index: 7, kind: output, shape index: {1}]
  %8 = xla_tuple %s6, %s7
  %s9 = sld [smem:[#allocation0]]
  $region42: #{tpu_custom_call.1} parent=0
    _
  %s11 = ssub.s32 1, %s9
  %s12 = scalar_select 0, %s11, %s9
  $region1: #{tpu_custom_call.1} parent=0
    #allocation2 [shape = 'u8[1024]{0}', space=vmem, size = 0x400, scoped, tag = 'output window, operand 0, single buffered']
    #allocation3 [shape = 's32[1]{0}', space=sflag, size = 0x4, scoped, tag = 'scoped memory for tpu_custom_call.1']
    #allocation4 [shape = 'u8[1024]{0}', space=vmem, size = 0x400, scoped, tag = 'output window, operand 1, single buffered']
    #allocation5 [shape = 's32[1]{0}', space=sflag, size = 0x4, scoped, tag = 'scoped memory for tpu_custom_call.1']
    %13 = vsyncpa [#allocation3], 0
    %14 = vsyncpa [#allocation5], 0
    // Predicated region
    $region2: #{tpu_custom_call.1} parent=1 // pred_check
      _
    $region3: #{tpu_custom_call.1} parent=1 // pred_check_branch
      %16 = sbr.rel (0) target = $region5
    $region4: #{tpu_custom_call.1} parent=1 // pred_region
      _
    $region5: #{tpu_custom_call.1} parent=1 // pred_fallthru
      _
    // Predicated region
    $region6: #{tpu_custom_call.1} parent=1 // pred_check
      _
    $region7: #{tpu_custom_call.1} parent=1 // pred_check_branch
      %18 = sbr.rel (0) target = $region9
    $region8: #{tpu_custom_call.1} parent=1 // pred_region
      _
    $region9: #{tpu_custom_call.1} parent=1 // pred_fallthru
      _
    // Predicated region
    $region10: #{tpu_custom_call.1} parent=1 // pred_check
      _
    $region11: #{tpu_custom_call.1} parent=1 // pred_check_branch
      %20 = sbr.rel (0) target = $region13
    $region12: #{tpu_custom_call.1} parent=1 // pred_region
      _
    $region13: #{tpu_custom_call.1} parent=1 // pred_fallthru
      _
    // Predicated region
    $region14: #{tpu_custom_call.1} parent=1 // pred_check
      _
    $region15: #{tpu_custom_call.1} parent=1 // pred_check_branch
      %22 = sbr.rel (0) target = $region17
    $region16: #{tpu_custom_call.1} parent=1 // pred_region
      _
    $region17: #{tpu_custom_call.1} parent=1 // pred_fallthru
      _
    // Predicated region
    $region18: #{tpu_custom_call.1} parent=1 // pred_check
      _
    $region19: #{tpu_custom_call.1} parent=1 // pred_check_branch
      %24 = sbr.rel (0) target = $region21
    $region20: #{tpu_custom_call.1} parent=1 // pred_region
      _
    $region21: #{tpu_custom_call.1} parent=1 // pred_fallthru
      _
    // Predicated region
    $region22: #{tpu_custom_call.1} parent=1 // pred_check
      _
    $region23: #{tpu_custom_call.1} parent=1 // pred_check_branch
      %26 = sbr.rel (0) target = $region25
    $region24: #{tpu_custom_call.1} parent=1 // pred_region
      _
    $region25: #{tpu_custom_call.1} parent=1 // pred_fallthru
      _
    %v27 = vld [vmem:[%s0] sm:$0x3]
    %v28 = vld [vmem:[%s2] sm:$0xff]
    %v29 = vld [vmem:[%s2 + $0x8] sm:$0xff]
    %v30 = vld [vmem:[%s2 + $0x10] sm:$0xff]
    %v31 = vld [vmem:[%s2 + $0x18] sm:$0xff]
    %v32 = vld [vmem:[%s3] sm:$0x1]
    %v34 = vlaneseq
    %v35 = vshrl.u32 %v34, 7
    %v36 = vsub.s32 0, %v35
    %v37 = vrot.slane %v32, %v36
    %vm39 = vcmask 261120
    %v41 = vsel %vm39, %v27, 0
    %43 = vmatprep.subr.mxu0 0.0
    %44 = vmatpush1.msra.mxu0 0.0
    %45 = vmatprep.subr.mxu0 0.0
    %46 = vmatpush1.msra.mxu0 0.0
    %47 = vmatprep.subr.mxu0 0.0
    %48 = vmatpush1.msra.mxu0 0.0
    %49 = vmatprep.subr.mxu0 0.0
    %50 = vmatpush1.msra.mxu0 0.0
    %51 = vmatprep.subr.mxu0 0.0
    %52 = vmatpush1.msra.mxu0 0.0
    %53 = vmatprep.subr.mxu0 0.0
    %54 = vmatpush1.msra.mxu0 0.0
    %55 = vmatprep.subr.mxu0 0.0
    %56 = vmatpush1.msra.mxu0 0.0
    %57 = vmatprep.subr.mxu0 0.0
    %58 = vmatpush1.msra.mxu0 0.0
    %59 = vmatprep.subr.mxu0 0.0
    %60 = vmatpush1.msra.mxu0 0.0
    %61 = vmatprep.subr.mxu0 0.0
    %62 = vmatpush1.msra.mxu0 0.0
    %63 = vmatprep.subr.mxu0 0.0
    %64 = vmatpush1.msra.mxu0 0.0
    %65 = vmatprep.subr.mxu0 0.0
    %66 = vmatpush1.msra.mxu0 0.0
    %67 = vmatprep.subr.mxu0 0.0
    %68 = vmatpush1.msra.mxu0 %v31
    %69 = vmatprep.subr.mxu0 0.0
    %70 = vmatpush1.msra.mxu0 %v30
    %71 = vmatprep.subr.mxu0 0.0
    %72 = vmatpush1.msra.mxu0 %v29
    %73 = vmatprep.subr.mxu0 0.0
    %74 = vmatpush1.msra.mxu0 %v28
    %75 = vmatprep.subr.mxu0 0.0
    %76 = vmatpush2.msra.mxu0 0.0
    %77 = vmatprep.subr.mxu0 0.0
    %78 = vmatpush2.msra.mxu0 0.0
    %79 = vmatprep.subr.mxu0 0.0
    %80 = vmatpush2.msra.mxu0 0.0
    %81 = vmatprep.subr.mxu0 0.0
    %82 = vmatpush2.msra.mxu0 0.0
    %83 = vmatprep.subr.mxu0 0.0
    %84 = vmatpush2.msra.mxu0 0.0
    %85 = vmatprep.subr.mxu0 0.0
    %86 = vmatpush2.msra.mxu0 0.0
    %87 = vmatprep.subr.mxu0 0.0
    %88 = vmatpush2.msra.mxu0 0.0
    %89 = vmatprep.subr.mxu0 0.0
    %90 = vmatpush2.msra.mxu0 0.0
    %91 = vmatprep.subr.mxu0 0.0
    %92 = vmatpush2.msra.mxu0 0.0
    %93 = vmatprep.subr.mxu0 0.0
    %94 = vmatpush2.msra.mxu0 0.0
    %95 = vmatprep.subr.mxu0 0.0
    %96 = vmatpush2.msra.mxu0 0.0
    %97 = vmatprep.subr.mxu0 0.0
    %98 = vmatpush2.msra.mxu0 0.0
    %99 = vmatprep.subr.mxu0 0.0
    %100 = vmatpush2.msra.mxu0 0.0
    %101 = vmatprep.subr.mxu0 0.0
    %102 = vmatpush2.msra.mxu0 0.0
    %103 = vmatprep.subr.mxu0 0.0
    %104 = vmatpush2.msra.mxu0 0.0
    %105 = vmatprep.subr.mxu0 0.0
    %106 = vmatpush2.msra.mxu0 0.0
    %107 = vmatprep.mubr.f32.mxu0 0.0
    %108 = vmatmul.mubr.f32.gmra.mxu0 %v41
    %v109 = vpop.f32.mrf.mxu0
    %v110 = vadd.f32 %v37, %v109
    %v111 = vpop.f32.mrf.mxu0
    %112 = vdwg.mxu0
    %vm113 = vcmask 386048
    %114 = vst.msk [vmem:[#allocation2] sm:$0x3] %vm113, %v110
    %v115 = vld [vmem:[%s1] sm:$0x3]
    %v116 = vsub.f32 0.0, %v115
    %v117 = vmul.f32 %v116, 1.442695
    %v118 = vpow.pop %v117
    %v119 = vadd.f32 %v118, 1.0
    %v120 = vrcp.pop %v119
    %v121 = vmul.f32 %v115, %v120
    %v122 = vld [vmem:[%s4] sm:$0xff]
    %v123 = vld [vmem:[%s4 + $0x8] sm:$0xff]
    %v124 = vld [vmem:[%s4 + $0x10] sm:$0xff]
    %v125 = vld [vmem:[%s4 + $0x18] sm:$0xff]
    %v126 = vld [vmem:[%s5] sm:$0x1]
    %v128 = vlaneseq
    %v129 = vshrl.u32 %v128, 7
    %v130 = vsub.s32 0, %v129
    %v131 = vrot.slane %v126, %v130
    %v134 = vsel %vm39, %v121, 0
    %136 = vmatprep.subr.mxu0 0.0
    %137 = vmatpush1.msra.mxu0 0.0
    %138 = vmatprep.subr.mxu0 0.0
    %139 = vmatpush1.msra.mxu0 0.0
    %140 = vmatprep.subr.mxu0 0.0
    %141 = vmatpush1.msra.mxu0 0.0
    %142 = vmatprep.subr.mxu0 0.0
    %143 = vmatpush1.msra.mxu0 0.0
    %144 = vmatprep.subr.mxu0 0.0
    %145 = vmatpush1.msra.mxu0 0.0
    %146 = vmatprep.subr.mxu0 0.0
    %147 = vmatpush1.msra.mxu0 0.0
    %148 = vmatprep.subr.mxu0 0.0
    %149 = vmatpush1.msra.mxu0 0.0
    %150 = vmatprep.subr.mxu0 0.0
    %151 = vmatpush1.msra.mxu0 0.0
    %152 = vmatprep.subr.mxu0 0.0
    %153 = vmatpush1.msra.mxu0 0.0
    %154 = vmatprep.subr.mxu0 0.0
    %155 = vmatpush1.msra.mxu0 0.0
    %156 = vmatprep.subr.mxu0 0.0
    %157 = vmatpush1.msra.mxu0 0.0
    %158 = vmatprep.subr.mxu0 0.0
    %159 = vmatpush1.msra.mxu0 0.0
    %160 = vmatprep.subr.mxu0 0.0
    %161 = vmatpush1.msra.mxu0 %v125
    %162 = vmatprep.subr.mxu0 0.0
    %163 = vmatpush1.msra.mxu0 %v124
    %164 = vmatprep.subr.mxu0 0.0
    %165 = vmatpush1.msra.mxu0 %v123
    %166 = vmatprep.subr.mxu0 0.0
    %167 = vmatpush1.msra.mxu0 %v122
    %168 = vmatprep.subr.mxu0 0.0
    %169 = vmatpush2.msra.mxu0 0.0
    %170 = vmatprep.subr.mxu0 0.0
    %171 = vmatpush2.msra.mxu0 0.0
    %172 = vmatprep.subr.mxu0 0.0
    %173 = vmatpush2.msra.mxu0 0.0
    %174 = vmatprep.subr.mxu0 0.0
    %175 = vmatpush2.msra.mxu0 0.0
    %176 = vmatprep.subr.mxu0 0.0
    %177 = vmatpush2.msra.mxu0 0.0
    %178 = vmatprep.subr.mxu0 0.0
    %179 = vmatpush2.msra.mxu0 0.0
    %180 = vmatprep.subr.mxu0 0.0
    %181 = vmatpush2.msra.mxu0 0.0
    %182 = vmatprep.subr.mxu0 0.0
    %183 = vmatpush2.msra.mxu0 0.0
    %184 = vmatprep.subr.mxu0 0.0
    %185 = vmatpush2.msra.mxu0 0.0
    %186 = vmatprep.subr.mxu0 0.0
    %187 = vmatpush2.msra.mxu0 0.0
    %188 = vmatprep.subr.mxu0 0.0
    %189 = vmatpush2.msra.mxu0 0.0
    %190 = vmatprep.subr.mxu0 0.0
    %191 = vmatpush2.msra.mxu0 0.0
    %192 = vmatprep.subr.mxu0 0.0
    %193 = vmatpush2.msra.mxu0 0.0
    %194 = vmatprep.subr.mxu0 0.0
    %195 = vmatpush2.msra.mxu0 0.0
    %196 = vmatprep.subr.mxu0 0.0
    %197 = vmatpush2.msra.mxu0 0.0
    %198 = vmatprep.subr.mxu0 0.0
    %199 = vmatpush2.msra.mxu0 0.0
    %200 = vmatprep.mubr.f32.mxu0 0.0
    %201 = vmatmul.mubr.f32.gmra.mxu0 %v134
    %v202 = vpop.f32.mrf.mxu0
    %v203 = vadd.f32 %v131, %v202
    %v204 = vpop.f32.mrf.mxu0
    %205 = vdwg.mxu0
    %vm206 = vcmask 123904
    %207 = vst.msk [vmem:[#allocation4] sm:$0x3] %vm206, %v203
    // Predicated region
    $region26: #{tpu_custom_call.1} parent=1 // pred_check
      _
    $region27: #{tpu_custom_call.1} parent=1 // pred_check_branch
      %209 = sbr.rel (0) target = $region29
    $region28: #{tpu_custom_call.1} parent=1 // pred_region
      %s211 = ssub.s32 32, 32
      %212 = vsyncadd [#allocation3], %s211
      %s214 = sshll.u32 [#allocation2], 4
      %s215 = int_to_ptr.vmem [resolvable:$true] %s214
      %217 = dma.vmem_to_hbm [thread:$0]  %s215, 32, %s6, [#allocation3]
    $region29: #{tpu_custom_call.1} parent=1 // pred_fallthru
      _
    // Predicated region
    $region30: #{tpu_custom_call.1} parent=1 // pred_check
      _
    $region31: #{tpu_custom_call.1} parent=1 // pred_check_branch
      %219 = sbr.rel (0) target = $region33
    $region32: #{tpu_custom_call.1} parent=1 // pred_region
      %s221 = ssub.s32 32, 32
      %222 = vsyncadd [#allocation5], %s221
      %s224 = sshll.u32 [#allocation4], 4
      %s225 = int_to_ptr.vmem [resolvable:$true] %s224
      %227 = dma.vmem_to_hbm [thread:$0]  %s225, 32, %s7, [#allocation5]
    $region33: #{tpu_custom_call.1} parent=1 // pred_fallthru
      _
    // Predicated region
    $region34: #{tpu_custom_call.1} parent=1 // pred_check
      _
    $region35: #{tpu_custom_call.1} parent=1 // pred_check_branch
      %229 = sbr.rel (0) target = $region37
    $region36: #{tpu_custom_call.1} parent=1 // pred_region
      %230 = dma.done [#allocation3], 32
    $region37: #{tpu_custom_call.1} parent=1 // pred_fallthru
      _
    // Predicated region
    $region38: #{tpu_custom_call.1} parent=1 // pred_check
      _
    $region39: #{tpu_custom_call.1} parent=1 // pred_check_branch
      %232 = sbr.rel (0) target = $region41
    $region40: #{tpu_custom_call.1} parent=1 // pred_region
      %233 = dma.done [#allocation5], 32
    $region41: #{tpu_custom_call.1} parent=1 // pred_fallthru
      _
    %234 = vsyncpa [#allocation3], 1
    %235 = vsyncpa [#allocation5], 1

</llo_original>
